<compile_context>
chip_gen: v5e
topology: v5e:2x2
jax: 0.10.0
libtpu: 0.0.40
codegen_flags: <defaults>
</compile_context>

<pallas_src>
import numpy as np
import jax
import jax.numpy as jnp
from jax.experimental import pallas as pl
from jax.experimental.pallas import tpu as pltpu


# ------------------------- parameter setup (host glue) ----------------------

def gaussian_1d(sigma: float, truncated: float = 4.0) -> np.ndarray:
    """MONAI gaussian_1d: normalized 1-D Gaussian taps (float32, odd length)."""
    if sigma <= 0 or truncated <= 0:
        raise ValueError("sigma and truncated must be positive.")
    tail = int(sigma * truncated + 0.5)
    xs = np.arange(-tail, tail + 1, dtype=np.float64)
    out = np.exp(-0.5 / (sigma * sigma) * xs * xs)
    out = out / out.sum()
    return out.astype(np.float32)


def same_padding(kernel_size: int) -> int:
    return (kernel_size - 1) // 2


def conv_matrix(kern: np.ndarray, n: int) -> np.ndarray:
    """Banded matrix M[out, in] = kern[in - out + pad] (zero outside the band).

    out = M @ x  <=>  cross-correlation of x with `kern` using zero "same"
    padding, i.e. exactly F.conv1d/2d(padding=same_padding, groups=C) per axis.
    """
    k = kern.shape[0]
    pad = same_padding(k)
    i = np.arange(n)[:, None]   # output index
    j = np.arange(n)[None, :]   # input index
    idx = j - i + pad
    valid = (idx >= 0) & (idx < k)
    return np.where(valid, kern[np.clip(idx, 0, k - 1)], np.float32(0.0)).astype(np.float32)


# ------------------------------ Pallas kernel -------------------------------

def _mm_kernel(l_ref, r_ref, o_ref):
    # One MXU matmul per grid step; operands already in compute dtype (no
    # per-block VPU cast), f32 accumulation, single cast on store.
    o_ref[...] = jnp.dot(
        l_ref[...], r_ref[...], preferred_element_type=jnp.float32
    ).astype(o_ref.dtype)


# ------------------------------ tiling helpers -------------------------------

_TARGET_BLOCK_BYTES = 1 << 20   # ~1 MiB of data per grid step (measured sweet spot)
_ALIGN = 128                    # lane / MXU alignment


def _round_up(v: int, m: int) -> int:
    return ((v + m - 1) // m) * m


def _choose_tile(total: int, bytes_per_unit: int) -> int:
    """128-aligned tile length along the tiled axis targeting ~1 MiB blocks."""
    t = max(1, _TARGET_BLOCK_BYTES // max(1, bytes_per_unit))
    t = max(_ALIGN, (t // _ALIGN) * _ALIGN)
    return min(t, _round_up(total, _ALIGN))


def _vmem_limit(*buffer_bytes: int) -> int:
    # Double-buffered blocks + resident banded matrix + headroom.
    # Stays well under v7x's 64 MiB physical VMEM for moderate H/W.
    need = 2 * sum(int(b) for b in buffer_bytes) + (4 << 20)
    return int(min(max(need, 8 << 20), 96 << 20))


def _left_apply(mat: jnp.ndarray, x2d: jnp.ndarray, out_dtype) -> jnp.ndarray:
    """mat(N,N) @ x2d(N,L), tiled over L (lane axis) in 128-aligned blocks."""
    n = mat.shape[0]
    l = x2d.shape[1]
    isz = np.dtype(x2d.dtype).itemsize
    osz = np.dtype(out_dtype).itemsize
    msz = np.dtype(mat.dtype).itemsize

    tl = _choose_tile(l, n * isz)
    lp = _round_up(l, tl)
    if lp != l:
        x2d = jnp.pad(x2d, ((0, 0), (0, lp - l)))

    out = pl.pallas_call(
        _mm_kernel,
        out_shape=jax.ShapeDtypeStruct((n, lp), out_dtype),
        grid=(lp // tl,),
        in_specs=[
            pl.BlockSpec((n, n), lambda j: (0, 0)),    # banded matrix, resident
            pl.BlockSpec((n, tl), lambda j: (0, j)),   # lane-dense data block
        ],
        out_specs=pl.BlockSpec((n, tl), lambda j: (0, j)),
        compiler_params=pltpu.CompilerParams(
            dimension_semantics=("parallel",),
            vmem_limit_bytes=_vmem_limit(n * n * msz, n * tl * isz, n * tl * osz),
        ),
        cost_estimate=pl.CostEstimate(
            flops=2 * n * n * lp,
            transcendentals=0,
            bytes_accessed=n * n * msz + n * lp * isz + n * lp * osz,
        ),
    )(mat, x2d)
    return out if lp == l else out[:, :l]


def _right_apply(x2d: jnp.ndarray, mat: jnp.ndarray, out_dtype) -> jnp.ndarray:
    """x2d(R,N) @ mat(N,N), tiled over R (sublane axis) in 128-aligned blocks."""
    r, n = x2d.shape
    isz = np.dtype(x2d.dtype).itemsize
    osz = np.dtype(out_dtype).itemsize
    msz = np.dtype(mat.dtype).itemsize

    tr = _choose_tile(r, n * isz)
    rp = _round_up(r, tr)
    if rp != r:
        x2d = jnp.pad(x2d, ((0, rp - r), (0, 0)))

    out = pl.pallas_call(
        _mm_kernel,
        out_shape=jax.ShapeDtypeStruct((rp, n), out_dtype),
        grid=(rp // tr,),
        in_specs=[
            pl.BlockSpec((tr, n), lambda i: (i, 0)),   # row tile of data
            pl.BlockSpec((n, n), lambda i: (0, 0)),    # banded matrix, resident
        ],
        out_specs=pl.BlockSpec((tr, n), lambda i: (i, 0)),
        compiler_params=pltpu.CompilerParams(
            dimension_semantics=("parallel",),
            vmem_limit_bytes=_vmem_limit(n * n * msz, tr * n * isz, tr * n * osz),
        ),
        cost_estimate=pl.CostEstimate(
            flops=2 * rp * n * n,
            transcendentals=0,
            bytes_accessed=n * n * msz + rp * n * isz + rp * n * osz,
        ),
    )(x2d, mat)
    return out if rp == r else out[:r]


# ------------------------------- public wrapper ------------------------------

def gaussian_filter_2d(x: jnp.ndarray, sigma, truncated: float = 4.0,
                       compute_dtype=jnp.bfloat16) -> jnp.ndarray:
    """Pallas equivalent of GaussianFilter(spatial_dims=2, sigma, truncated)(x).

    compute_dtype: dtype fed to the MXU (bf16 recommended on v5e/v6e/v7x;
    accumulation is always f32; output keeps x.dtype). Use jnp.float32 for
    bit-level parity with the PyTorch float module.
    """
    if isinstance(sigma, (int, float)):
        sigma = (float(sigma), float(sigma))
    B, C, H, W = x.shape

    kh = gaussian_1d(sigma[0], truncated)                         # kernel_0 (H axis)
    kw = gaussian_1d(sigma[1], truncated)                         # kernel_1 (W axis)
    A = jnp.asarray(conv_matrix(kh, H), dtype=compute_dtype)      # mid = A @ x
    Bm = jnp.asarray(conv_matrix(kw, W).T, dtype=compute_dtype)   # out = mid @ Bm

    # TODO(synk): for very large H/W exploit the banded structure (k-tap
    # shift-and-add on the VPU or band-blocked contraction) instead of dense
    # HxH / WxW matrices; dense is exact but does O(H+W) MACs/output vs O(kh+kw)
    # and the resident matrices must fit v7x's 64 MiB VMEM.

    # ---- H pass: one lane-dense matmul A(H,H) @ X(H, B*C*W) ----
    x1 = jnp.transpose(x, (2, 0, 1, 3)).reshape(H, B * C * W)
    x1 = x1.astype(compute_dtype)          # fused with the transpose copy by XLA
    mid = _left_apply(A, x1, out_dtype=compute_dtype)             # (H, B*C*W)

    # ---- W pass: (B*C*H, W) @ Bm(W,W) ----
    x2 = jnp.transpose(mid.reshape(H, B, C, W), (1, 2, 0, 3)).reshape(B * C * H, W)
    out = _right_apply(x2, Bm, out_dtype=x.dtype)                 # (B*C*H, W)
    return out.reshape(B, C, H, W)


# ----------------------------- pure-JAX reference ----------------------------

def _reference(x, sigma, truncated=4.0):
    """Literal shift-and-add separable conv in f32 (mirrors grouped F.conv2d)."""
    B, C, H, W = x.shape
    kh = gaussian_1d(sigma[0], truncated)
    kw = gaussian_1d(sigma[1], truncated)
    ph, pw = same_padding(kh.shape[0]), same_padding(kw.shape[0])
    xp = jnp.pad(x, ((0, 0), (0, 0), (ph, ph), (0, 0)))
    mid = sum(float(kh[k]) * xp[:, :, k:k + H, :] for k in range(kh.shape[0]))
    yp = jnp.pad(mid, ((0, 0), (0, 0), (0, 0), (pw, pw)))
    out = sum(float(kw[k]) * yp[:, :, :, k:k + W] for k in range(kw.shape[0]))
    return out


# ---------------------------------- main -------------------------------------

if __name__ == "__main__":
    key = jax.random.PRNGKey(0)
    B, C, H, W = 2, 4, 16, 16
    sigma = (1.5, 1.5)          # -> kernel size 13, padding 6 per spatial dim
    x = jax.random.normal(key, (B, C, H, W), dtype=jnp.float32)

    y_ref = jax.block_until_ready(_reference(x, sigma))

    # bf16-on-MXU fast path (default) — f32 accumulation, output stays f32.
    y_bf16 = jax.block_until_ready(gaussian_filter_2d(x, sigma))
    assert y_bf16.shape == (B, C, H, W)
    assert y_bf16.dtype == x.dtype
    assert jnp.max(jnp.abs(y_bf16 - y_ref)) < 2e-2

    # f32 compute path for tight parity with the PyTorch float module.
    y_f32 = jax.block_until_ready(
        gaussian_filter_2d(x, sigma, compute_dtype=jnp.float32))
    assert jnp.max(jnp.abs(y_f32 - y_ref)) < 1e-4

    print("KERNEL_OK")
</pallas_src>

<mosaic_0001>
module attributes {stable_mosaic.version = 11 : i64} {
  func.func @_mm_kernel(%arg0: i32, %arg1: memref<16x16xbf16, #tpu.memory_space<vmem>>, %arg2: memref<16x128xbf16, #tpu.memory_space<vmem>>, %arg3: memref<16x128xbf16, #tpu.memory_space<vmem>>) attributes {dimension_semantics = [#tpu.dimension_semantics<parallel>], iteration_bounds = array<i64: 1>, scalar_prefetch = 0 : i64, scratch_operands = 0 : i64, tpu.core_type = #tpu.core_type<tc>, window_params = [{pipeline_mode = #tpu.pipeline_mode<synchronous>, transform_indices = @transform_0, window_bounds = array<i64: 16, 16>}, {transform_indices = @transform_1, window_bounds = array<i64: 16, 128>}, {transform_indices = @transform_2, window_bounds = array<i64: 16, 128>}]} {
    %c0 = arith.constant 0 : index
    %c0_0 = arith.constant 0 : index
    %0 = vector.load %arg1[%c0, %c0_0] : memref<16x16xbf16, #tpu.memory_space<vmem>>, vector<16x16xbf16>
    %c0_1 = arith.constant 0 : index
    %c0_2 = arith.constant 0 : index
    %1 = vector.load %arg2[%c0_1, %c0_2] : memref<16x128xbf16, #tpu.memory_space<vmem>>, vector<16x128xbf16>
    %cst = arith.constant dense<0.000000e+00> : vector<16x128xf32>
    %2 = tpu.matmul %0, %1, %cst {dimension_numbers = #tpu.dot_dimension_numbers<[1], [0], [0], [1], [0, 0, 1, 1], [], []>} : vector<16x16xbf16>, vector<16x128xbf16>, vector<16x128xf32> -> vector<16x128xf32>
    %3 = arith.truncf %2 : vector<16x128xf32> to vector<16x128xbf16>
    %c0_3 = arith.constant 0 : index
    %c0_4 = arith.constant 0 : index
    %4 = vector.load %arg3[%c0_3, %c0_4] : memref<16x128xbf16, #tpu.memory_space<vmem>>, vector<16x128xbf16>
    tpu.vector_store %arg3[%c0_3, %c0_4], %3 {strides = array<i32>} : memref<16x128xbf16, #tpu.memory_space<vmem>>, vector<16x128xbf16>,
    return
  }
  func.func @transform_0(%arg0: i32) -> (i32, i32) {
    %c0_i32 = arith.constant 0 : i32
    %c0_i32_0 = arith.constant 0 : i32
    %c0_i32_1 = arith.constant 0 : i32
    return %c0_i32, %c0_i32_0 : i32, i32
  }
  func.func @transform_1(%arg0: i32) -> (i32, i32) {
    %c0_i32 = arith.constant 0 : i32
    %c0_i32_0 = arith.constant 0 : i32
    return %c0_i32, %arg0 : i32, i32
  }
  func.func @transform_2(%arg0: i32) -> (i32, i32) {
    %c0_i32 = arith.constant 0 : i32
    %c0_i32_0 = arith.constant 0 : i32
    return %c0_i32, %arg0 : i32, i32
  }
}

</mosaic_0001>

<llo_original>
// kernel: tpu_custom_call.1
$region0: #{tpu_custom_call.1}
  #allocation0 [shape = 'u32[]', space=smem, size = 0x4, offset = 0x4, fixed_abs, tag = 'smem constant byte address 0x4 - core index']
  #allocation1 [shape = 'u32[72,128]{1,0:T(1,128)}', space=vmem, size = 0x9000, scoped, tag = 'internal scratch']
  %s0 = inlined_call_operand.hbm [shape: bf16[16,16], index: 0, kind: input, shape index: {}]
  %s1 = inlined_call_operand.hbm [shape: bf16[16,128], index: 1, kind: input, shape index: {}]
  %s2 = inlined_call_operand.hbm [shape: bf16[16,128], index: 2, kind: output, shape index: {}]
  %s3 = sld [smem:[#allocation0]]
  $region26: #{tpu_custom_call.1} parent=0
    _
  %s5 = ssub.s32 1, %s3
  %s6 = scalar_select 0, %s5, %s3
  $region1: #{tpu_custom_call.1} parent=0
    #allocation2 [shape = 'u8[4096]{0}', space=vmem, size = 0x1000, scoped, tag = 'input window, operand 0, single buffered']
    #allocation3 [shape = 's32[1]{0}', space=sflag, size = 0x4, scoped, tag = 'scoped memory for tpu_custom_call.1']
    #allocation4 [shape = 's32[1]{0}', space=sflag, size = 0x4, scoped, tag = 'scoped memory for tpu_custom_call.1']
    #allocation5 [shape = 'u8[4096]{0}', space=vmem, size = 0x1000, scoped, tag = 'input window, operand 1, single buffered']
    #allocation6 [shape = 's32[1]{0}', space=sflag, size = 0x4, scoped, tag = 'scoped memory for tpu_custom_call.1']
    #allocation7 [shape = 'u8[4096]{0}', space=vmem, size = 0x1000, scoped, tag = 'output window, operand 0, single buffered']
    %7 = vsyncpa [#allocation3], 0
    %8 = vsyncpa [#allocation6], 0
    %9 = vsyncpa [#allocation4], 0
    // Predicated region
    $region2: #{tpu_custom_call.1} parent=1 // pred_check
      _
    $region3: #{tpu_custom_call.1} parent=1 // pred_check_branch
      %11 = sbr.rel (0) target = $region5
    $region4: #{tpu_custom_call.1} parent=1 // pred_region
      %13 = vsyncadd [#allocation3], 0
      %s14 = sshll.u32 %s0, 4
      %s15 = int_to_ptr.hbm [resolvable:$true] %s14
      %s16 = sshll.u32 [#allocation2], 4
      %s17 = int_to_ptr.vmem [resolvable:$true] %s16
      %22 = dma.hbm_to_vmem [thread:$0]  %s15, 128, %s17, [#allocation3], 64, 64, 4
    $region5: #{tpu_custom_call.1} parent=1 // pred_fallthru
      _
    // Predicated region
    $region6: #{tpu_custom_call.1} parent=1 // pred_check
      _
    $region7: #{tpu_custom_call.1} parent=1 // pred_check_branch
      %24 = sbr.rel (0) target = $region9
    $region8: #{tpu_custom_call.1} parent=1 // pred_region
      %26 = vsyncadd [#allocation6], 0
      %s27 = sshll.u32 %s1, 4
      %s28 = int_to_ptr.hbm [resolvable:$true] %s27
      %s29 = sshll.u32 [#allocation5], 4
      %s30 = int_to_ptr.vmem [resolvable:$true] %s29
      %35 = dma.hbm_to_vmem [thread:$0]  %s28, 128, %s30, [#allocation6], 64, 64, 4
    $region9: #{tpu_custom_call.1} parent=1 // pred_fallthru
      _
    // Predicated region
    $region10: #{tpu_custom_call.1} parent=1 // pred_check
      _
    $region11: #{tpu_custom_call.1} parent=1 // pred_check_branch
      %37 = sbr.rel (0) target = $region13
    $region12: #{tpu_custom_call.1} parent=1 // pred_region
      %39 = dma.done [#allocation3], 128
    $region13: #{tpu_custom_call.1} parent=1 // pred_fallthru
      _
    // Predicated region
    $region14: #{tpu_custom_call.1} parent=1 // pred_check
      _
    $region15: #{tpu_custom_call.1} parent=1 // pred_check_branch
      %41 = sbr.rel (0) target = $region17
    $region16: #{tpu_custom_call.1} parent=1 // pred_region
      %43 = dma.done [#allocation6], 128
    $region17: #{tpu_custom_call.1} parent=1 // pred_fallthru
      _
    %v45 = vld [vmem:[#allocation2] sm:$0xf]
    %v46 = vld [vmem:[#allocation2 + $0x4] sm:$0xf]
    %v47 = vld [vmem:[#allocation5] sm:$0xf]
    %v48 = vld [vmem:[#allocation5 + $0x4] sm:$0xf]
    %v51 = vunpack.c.l.b16 %v45
    %v52 = vunpack.c.l.b16 %v46
    %v53 = vpack.c.b16 %v52, %v51
    %v56 = vunpack.c.l.b16 %v47
    %v57 = vunpack.c.l.b16 %v48
    %v58 = vpack.c.b16 %v57, %v56
    %vm60 = vcmask 130048
    %v62 = vsel %vm60, %v53, 0
    %64 = vmatpush.bf16.msra.mxu0 0
    %65 = vmatpush.bf16.msra.mxu0 0
    %66 = vmatpush.bf16.msra.mxu0 0
    %67 = vmatpush.bf16.msra.mxu0 0
    %68 = vmatpush.bf16.msra.mxu0 0
    %69 = vmatpush.bf16.msra.mxu0 0
    %70 = vmatpush.bf16.msra.mxu0 0
    %71 = vmatpush.bf16.msra.mxu0 %v58
    %72 = vmatmul.bf16.gmra.mxu0 %v62
    %v73 = vpop.f32.mrf.mxu0
    %v74 = vadd.f32 0.0, %v73
    %v75 = vpop.f32.mrf.mxu0
    %v76 = vadd.f32 0.0, %v75
    %77 = vdwg.mxu0
    %v78 = vpack.c.bf16 %v74, %v74
    %v79 = vpack.c.bf16 %v76, %v76
    %80 = vst [vmem:[#allocation7] sm:$0xf] %v78
    %81 = vst [vmem:[#allocation7 + $0x4] sm:$0xf] %v79
    // Predicated region
    $region18: #{tpu_custom_call.1} parent=1 // pred_check
      _
    $region19: #{tpu_custom_call.1} parent=1 // pred_check_branch
      %83 = sbr.rel (0) target = $region21
    $region20: #{tpu_custom_call.1} parent=1 // pred_region
      %85 = vsyncadd [#allocation4], 0
      %s86 = sshll.u32 [#allocation7], 4
      %s87 = int_to_ptr.vmem [resolvable:$true] %s86
      %s88 = sshll.u32 %s2, 4
      %s89 = int_to_ptr.hbm [resolvable:$true] %s88
      %94 = dma.vmem_to_hbm [thread:$0]  %s87, 128, %s89, [#allocation4], 64, 64, 4
    $region21: #{tpu_custom_call.1} parent=1 // pred_fallthru
      _
    // Predicated region
    $region22: #{tpu_custom_call.1} parent=1 // pred_check
      _
    $region23: #{tpu_custom_call.1} parent=1 // pred_check_branch
      %96 = sbr.rel (0) target = $region25
    $region24: #{tpu_custom_call.1} parent=1 // pred_region
      %98 = dma.done [#allocation4], 128
    $region25: #{tpu_custom_call.1} parent=1 // pred_fallthru
      _
    %99 = vsyncpa [#allocation3], 1
    %100 = vsyncpa [#allocation6], 1
    %101 = vsyncpa [#allocation4], 1

</llo_original>
